<compile_context>
chip_gen: v5e
topology: v5e:2x2
jax: 0.10.0
libtpu: 0.0.40
codegen_flags: <defaults>
</compile_context>

<pallas_src>
import functools
import math

import jax
import jax.numpy as jnp
from jax.experimental import pallas as pl
from jax.experimental.pallas import tpu as pltpu


def _round_up(n: int, m: int) -> int:
    return ((n + m - 1) // m) * m


# --------------------------------------------------------------------------- #
# Kernels (one batch tile each).                                              #
# --------------------------------------------------------------------------- #

def _ick_kernel_fused(latent_dim, x1_ref, x2_ref, w1_ref, b1_ref, w2_ref,
                      b2_ref, out_ref):
    """Fused path: one block-diagonal MXU matmul per layer.

    x1_ref : (TB, F1) f32     x2_ref : (TB, F2) f32
    w1_ref : (F1+F2, 2H) bf16  block_diag(w1a, w2a)   (pinned in VMEM)
    b1_ref : (1, 2H) f32
    w2_ref : (2H, 2D) bf16     block_diag(w1b, w2b)   (pinned in VMEM)
    b2_ref : (1, 2D) f32
    out_ref: (TB, 1) f32       sigmoid(sum_d f1*f2)
    """
    # In-kernel lane concat (cheap VMEM relayout) replaces the old wrapper-side
    # HBM concat; cast to bf16 afterwards for the MXU (f32 accumulation).
    x = jnp.concatenate([x1_ref[...], x2_ref[...]], axis=1).astype(jnp.bfloat16)
    h = jnp.dot(x, w1_ref[...], preferred_element_type=jnp.float32)
    h = jnp.maximum(h + b1_ref[...], 0.0)                            # ReLU, f32
    f = jnp.dot(h.astype(jnp.bfloat16), w2_ref[...],
                preferred_element_type=jnp.float32) + b2_ref[...]    # (TB, 2D)
    # ICK head: product over modalities, sum over latent dim, sigmoid.
    prod = f[:, :latent_dim] * f[:, latent_dim:]                     # (TB, D)
    out_ref[...] = jax.nn.sigmoid(jnp.sum(prod, axis=1, keepdims=True))


def _ick_kernel_unfused(x1_ref, x2_ref, w1a_ref, b1a_ref, w1b_ref, b1b_ref,
                        w2a_ref, b2a_ref, w2b_ref, b2b_ref, out_ref):
    """Per-modality path: two MXU matmuls per layer, no zero-block work."""
    x1 = x1_ref[...].astype(jnp.bfloat16)
    x2 = x2_ref[...].astype(jnp.bfloat16)
    h1 = jnp.maximum(
        jnp.dot(x1, w1a_ref[...], preferred_element_type=jnp.float32)
        + b1a_ref[...], 0.0)
    h2 = jnp.maximum(
        jnp.dot(x2, w2a_ref[...], preferred_element_type=jnp.float32)
        + b2a_ref[...], 0.0)
    f1 = jnp.dot(h1.astype(jnp.bfloat16), w1b_ref[...],
                 preferred_element_type=jnp.float32) + b1b_ref[...]
    f2 = jnp.dot(h2.astype(jnp.bfloat16), w2b_ref[...],
                 preferred_element_type=jnp.float32) + b2b_ref[...]
    out_ref[...] = jax.nn.sigmoid(jnp.sum(f1 * f2, axis=1, keepdims=True))


# --------------------------------------------------------------------------- #
# Wrapper.                                                                    #
# --------------------------------------------------------------------------- #

def prepare_binary_ick_params(params, *, fuse=None, mxu_width=128):
    """Hoisted (once per parameter set) weight preparation.

    fuse=None: fuse the two modality MLPs into block-diagonal weights only if
    the fused dims fit a single MXU tile (128 = conservative / v5e width; pass
    mxu_width=256 on v6e/v7x).  Otherwise keep per-modality bf16 weights so no
    zero-block FLOPs / doubled weight DMA is paid at large widths.
    """
    F1, H = params["w1a"].shape
    F2 = params["w2a"].shape[0]
    D = params["w1b"].shape[1]
    if fuse is None:
        fuse = (F1 + F2) <= mxu_width and 2 * H <= mxu_width and 2 * D <= mxu_width

    if fuse:
        w1 = jnp.zeros((F1 + F2, 2 * H), jnp.float32)
        w1 = w1.at[:F1, :H].set(params["w1a"]).at[F1:, H:].set(params["w2a"])
        b1 = jnp.concatenate([params["b1a"], params["b2a"]], axis=1)     # (1, 2H)
        w2 = jnp.zeros((2 * H, 2 * D), jnp.float32)
        w2 = w2.at[:H, :D].set(params["w1b"]).at[H:, D:].set(params["w2b"])
        b2 = jnp.concatenate([params["b1b"], params["b2b"]], axis=1)     # (1, 2D)
        weights = dict(w1=w1.astype(jnp.bfloat16), b1=b1,
                       w2=w2.astype(jnp.bfloat16), b2=b2)
    else:
        weights = dict(
            w1a=params["w1a"].astype(jnp.bfloat16), b1a=params["b1a"],
            w1b=params["w1b"].astype(jnp.bfloat16), b1b=params["b1b"],
            w2a=params["w2a"].astype(jnp.bfloat16), b2a=params["b2a"],
            w2b=params["w2b"].astype(jnp.bfloat16), b2b=params["b2b"])
    return dict(fuse=fuse, dims=dict(F1=F1, F2=F2, H=H, D=D), weights=weights)


def binary_ick(x1, x2, prep, *, tile_b=512):
    B, F1 = x1.shape
    F2 = x2.shape[1]
    dims = prep["dims"]
    assert F1 == dims["F1"] and F2 == dims["F2"]
    H, D = dims["H"], dims["D"]
    fuse = prep["fuse"]
    w = prep["weights"]

    # Batch tile: multiple of 16 sublanes (bf16 packing), capped at the batch.
    tile_b = max(16, _round_up(min(tile_b, _round_up(B, 16)), 16))
    # Keep at least two grid steps so the "parallel" batch axis can split
    # across v7x's two TensorCores (harmless on single-TC v5e/v6e).
    if B > 16:
        tile_b = min(tile_b, _round_up(-(-B // 2), 16))
    grid = (pl.cdiv(B, tile_b),)

    # x1/x2 streamed per batch tile (double-buffered by the pipeline); the last
    # partial tile is masked by the pipeline, no wrapper-side padding.
    x_specs = [pl.BlockSpec((tile_b, F1), lambda i: (i, 0)),
               pl.BlockSpec((tile_b, F2), lambda i: (i, 0))]
    if fuse:
        kernel = functools.partial(_ick_kernel_fused, D)
        w_args = (w["w1"], w["b1"], w["w2"], w["b2"])
        w_specs = [pl.BlockSpec((F1 + F2, 2 * H), lambda i: (0, 0)),
                   pl.BlockSpec((1, 2 * H), lambda i: (0, 0)),
                   pl.BlockSpec((2 * H, 2 * D), lambda i: (0, 0)),
                   pl.BlockSpec((1, 2 * D), lambda i: (0, 0))]
    else:
        kernel = _ick_kernel_unfused
        w_args = (w["w1a"], w["b1a"], w["w1b"], w["b1b"],
                  w["w2a"], w["b2a"], w["w2b"], w["b2b"])
        # Weights/biases pinned: same block every step -> resident in VMEM.
        w_specs = [pl.BlockSpec(a.shape, lambda i: (0, 0)) for a in w_args]

    out_spec = pl.BlockSpec((tile_b, 1), lambda i: (i, 0))

    # VMEM budget: x blocks + pinned weights (double-buffered) + f32 temporaries.
    wbytes = sum(int(a.size) * a.dtype.itemsize for a in w_args)
    est = (2 * tile_b * (F1 + F2) * 4            # x1/x2 blocks (f32, 2 buffers)
           + 2 * wbytes                          # pinned weights/biases (2 buffers)
           + 2 * tile_b * 4                      # output block
           + 4 * tile_b * (2 * H + 2 * D) * 4)   # h / f temporaries + bf16 copies
    vmem_limit = int(min(64 * 2 ** 20, max(16 * 2 ** 20, 2 * est)))

    # Real math FLOPs only (no zero-block work counted, even on the fused path).
    bp = grid[0] * tile_b
    flops = 2 * bp * (F1 * H + F2 * H + 2 * H * D)
    bytes_accessed = 4 * B * (F1 + F2) + wbytes + 4 * B

    out = pl.pallas_call(
        kernel,
        out_shape=jax.ShapeDtypeStruct((B, 1), jnp.float32),
        grid_spec=pltpu.PrefetchScalarGridSpec(
            num_scalar_prefetch=0,
            grid=grid,
            in_specs=x_specs + w_specs,
            out_specs=out_spec),
        compiler_params=pltpu.CompilerParams(
            dimension_semantics=("parallel",),
            vmem_limit_bytes=vmem_limit),
        cost_estimate=pl.CostEstimate(
            flops=flops, transcendentals=bp, bytes_accessed=bytes_accessed),
    )(x1, x2, *w_args)

    return out.reshape(-1)                                               # (B,)


# --------------------------------------------------------------------------- #
# Parameter init (matches torch nn.Linear defaults) and pure-JAX reference.   #
# --------------------------------------------------------------------------- #

def kaiming_uniform(key, shape, fan_in):
    # matches torch.nn.init.kaiming_uniform_(a=sqrt(5)) used by nn.Linear default init
    gain = math.sqrt(2.0 / (1.0 + 5.0))
    bound = gain * math.sqrt(3.0 / fan_in)
    return jax.random.uniform(key, shape, jnp.float32, -bound, bound)


def make_params(key, f1, f2, hidden, latent):
    ks = jax.random.split(key, 8)
    p = {}
    p["w1a"] = kaiming_uniform(ks[0], (f1, hidden), f1)
    p["b1a"] = jax.random.uniform(ks[1], (1, hidden), jnp.float32,
                                  -1.0 / math.sqrt(f1), 1.0 / math.sqrt(f1))
    p["w1b"] = kaiming_uniform(ks[2], (hidden, latent), hidden)
    p["b1b"] = jax.random.uniform(ks[3], (1, latent), jnp.float32,
                                  -1.0 / math.sqrt(hidden), 1.0 / math.sqrt(hidden))
    p["w2a"] = kaiming_uniform(ks[4], (f2, hidden), f2)
    p["b2a"] = jax.random.uniform(ks[5], (1, hidden), jnp.float32,
                                  -1.0 / math.sqrt(f2), 1.0 / math.sqrt(f2))
    p["w2b"] = kaiming_uniform(ks[6], (hidden, latent), hidden)
    p["b2b"] = jax.random.uniform(ks[7], (1, latent), jnp.float32,
                                  -1.0 / math.sqrt(hidden), 1.0 / math.sqrt(hidden))
    return p


def binary_ick_ref(x1, x2, p, compute_dtype=jnp.float32):
    """Pure-JAX reference; compute_dtype mirrors the kernel's MXU operand dtype."""
    def mm(a, w):
        return jnp.dot(a.astype(compute_dtype), w.astype(compute_dtype),
                       preferred_element_type=jnp.float32)
    h1 = jnp.maximum(mm(x1, p["w1a"]) + p["b1a"], 0.0)
    f1 = mm(h1, p["w1b"]) + p["b1b"]
    h2 = jnp.maximum(mm(x2, p["w2a"]) + p["b2a"], 0.0)
    f2 = mm(h2, p["w2b"]) + p["b2b"]
    return jax.nn.sigmoid(jnp.sum(f1 * f2, axis=1))


if __name__ == "__main__":
    # batch, per-modality features, hidden, latent dim (small demo shapes).
    B, F1, F2, H, D = 40, 16, 16, 32, 32

    key = jax.random.PRNGKey(0)
    k_x1, k_x2, k_p = jax.random.split(key, 3)
    x1 = jax.random.normal(k_x1, (B, F1), jnp.float32)
    x2 = jax.random.normal(k_x2, (B, F2), jnp.float32)
    params = make_params(k_p, F1, F2, H, D)

    ref_bf16 = binary_ick_ref(x1, x2, params, jnp.bfloat16)  # matches kernel casts
    ref_f32 = binary_ick_ref(x1, x2, params, jnp.float32)    # original f32 semantics

    # Fused (block-diagonal) path: small dims -> auto-selects fusion.
    # tile_b=16 -> 3 batch tiles incl. a partial 8-row tile (exercises streaming,
    # pinned weights, and in-pipeline masking of the ragged last tile).
    prep_fused = prepare_binary_ick_params(params)
    out_fused = jax.block_until_ready(binary_ick(x1, x2, prep_fused, tile_b=16))

    # Unfused per-modality path (what large F/H/D would select); default tile_b
    # is capped so the grid still has >= 2 steps (32 + 8-row partial tile).
    prep_unfused = prepare_binary_ick_params(params, fuse=False)
    out_unfused = jax.block_until_ready(binary_ick(x1, x2, prep_unfused))

    for out in (out_fused, out_unfused):
        assert out.shape == (B,)
        assert jnp.allclose(out, ref_bf16, atol=2e-3, rtol=2e-3), (out, ref_bf16)
        assert jnp.allclose(out, ref_f32, atol=2e-2, rtol=2e-2), (out, ref_f32)
    print("KERNEL_OK")
</pallas_src>

<mosaic_0001>
module attributes {stable_mosaic.version = 11 : i64} {
  func.func @_ick_kernel_fused(%arg0: i32, %arg1: memref<16x16xf32, #tpu.memory_space<vmem>>, %arg2: memref<16x16xf32, #tpu.memory_space<vmem>>, %arg3: memref<32x64xbf16, #tpu.memory_space<vmem>>, %arg4: memref<1x64xf32, #tpu.memory_space<vmem>>, %arg5: memref<64x64xbf16, #tpu.memory_space<vmem>>, %arg6: memref<1x64xf32, #tpu.memory_space<vmem>>, %arg7: memref<16x1xf32, #tpu.memory_space<vmem>>) attributes {dimension_semantics = [#tpu.dimension_semantics<parallel>], iteration_bounds = array<i64: 3>, scalar_prefetch = 0 : i64, scratch_operands = 0 : i64, tpu.core_type = #tpu.core_type<tc>, window_params = [{transform_indices = @transform_0, window_bounds = array<i64: 16, 16>}, {transform_indices = @transform_1, window_bounds = array<i64: 16, 16>}, {pipeline_mode = #tpu.pipeline_mode<synchronous>, transform_indices = @transform_2, window_bounds = array<i64: 32, 64>}, {pipeline_mode = #tpu.pipeline_mode<synchronous>, transform_indices = @transform_3, window_bounds = array<i64: 1, 64>}, {pipeline_mode = #tpu.pipeline_mode<synchronous>, transform_indices = @transform_4, window_bounds = array<i64: 64, 64>}, {pipeline_mode = #tpu.pipeline_mode<synchronous>, transform_indices = @transform_5, window_bounds = array<i64: 1, 64>}, {transform_indices = @transform_6, window_bounds = array<i64: 16, 1>}]} {
    %c0 = arith.constant 0 : index
    %c0_0 = arith.constant 0 : index
    %0 = vector.load %arg1[%c0, %c0_0] : memref<16x16xf32, #tpu.memory_space<vmem>>, vector<16x16xf32>
    %c0_1 = arith.constant 0 : index
    %c0_2 = arith.constant 0 : index
    %1 = vector.load %arg2[%c0_1, %c0_2] : memref<16x16xf32, #tpu.memory_space<vmem>>, vector<16x16xf32>
    %2 = tpu.concatenate %0, %1 in 1 : vector<16x16xf32>, vector<16x16xf32> -> vector<16x32xf32>
    %3 = arith.truncf %2 : vector<16x32xf32> to vector<16x32xbf16>
    %c0_3 = arith.constant 0 : index
    %c0_4 = arith.constant 0 : index
    %4 = vector.load %arg3[%c0_3, %c0_4] : memref<32x64xbf16, #tpu.memory_space<vmem>>, vector<32x64xbf16>
    %cst = arith.constant dense<0.000000e+00> : vector<16x64xf32>
    %5 = tpu.matmul %3, %4, %cst {dimension_numbers = #tpu.dot_dimension_numbers<[1], [0], [0], [1], [0, 0, 1, 1], [], []>} : vector<16x32xbf16>, vector<32x64xbf16>, vector<16x64xf32> -> vector<16x64xf32>
    %c0_5 = arith.constant 0 : index
    %c0_6 = arith.constant 0 : index
    %6 = vector.load %arg4[%c0_5, %c0_6] : memref<1x64xf32, #tpu.memory_space<vmem>>, vector<1x64xf32>
    %7 = vector.broadcast %6 : vector<1x64xf32> to vector<16x64xf32>
    %8 = arith.addf %5, %7 : vector<16x64xf32>
    %cst_7 = arith.constant 0.000000e+00 : f32
    %9 = vector.broadcast %cst_7 : f32 to vector<16x64xf32>
    %10 = arith.maximumf %8, %9 : vector<16x64xf32>
    %11 = arith.truncf %10 : vector<16x64xf32> to vector<16x64xbf16>
    %c0_8 = arith.constant 0 : index
    %c0_9 = arith.constant 0 : index
    %12 = vector.load %arg5[%c0_8, %c0_9] : memref<64x64xbf16, #tpu.memory_space<vmem>>, vector<64x64xbf16>
    %cst_10 = arith.constant dense<0.000000e+00> : vector<16x64xf32>
    %13 = tpu.matmul %11, %12, %cst_10 {dimension_numbers = #tpu.dot_dimension_numbers<[1], [0], [0], [1], [0, 0, 1, 1], [], []>} : vector<16x64xbf16>, vector<64x64xbf16>, vector<16x64xf32> -> vector<16x64xf32>
    %c0_11 = arith.constant 0 : index
    %c0_12 = arith.constant 0 : index
    %14 = vector.load %arg6[%c0_11, %c0_12] : memref<1x64xf32, #tpu.memory_space<vmem>>, vector<1x64xf32>
    %15 = vector.broadcast %14 : vector<1x64xf32> to vector<16x64xf32>
    %16 = arith.addf %13, %15 : vector<16x64xf32>
    %17 = vector.extract_strided_slice %16 {offsets = [0, 0], sizes = [16, 32], strides = [1, 1]} : vector<16x64xf32> to vector<16x32xf32>
    %18 = vector.extract_strided_slice %16 {offsets = [0, 32], sizes = [16, 32], strides = [1, 1]} : vector<16x64xf32> to vector<16x32xf32>
    %19 = arith.mulf %17, %18 : vector<16x32xf32>
    %cst_13 = arith.constant dense<0.000000e+00> : vector<16xf32>
    %20 = vector.multi_reduction <add>, %19, %cst_13 [1] : vector<16x32xf32> to vector<16xf32>
    %21 = vector.shape_cast %20 : vector<16xf32> to vector<16x1xf32>
    %22 = arith.negf %21 : vector<16x1xf32>
    %23 = math.exp %22 : vector<16x1xf32>
    %cst_14 = arith.constant 1.000000e+00 : f32
    %24 = vector.broadcast %cst_14 : f32 to vector<16x1xf32>
    %25 = arith.addf %24, %23 : vector<16x1xf32>
    %26 = arith.divf %24, %25 : vector<16x1xf32>
    %c0_15 = arith.constant 0 : index
    %c0_16 = arith.constant 0 : index
    %27 = vector.load %arg7[%c0_15, %c0_16] : memref<16x1xf32, #tpu.memory_space<vmem>>, vector<16x1xf32>
    tpu.vector_store %arg7[%c0_15, %c0_16], %26 {strides = array<i32>} : memref<16x1xf32, #tpu.memory_space<vmem>>, vector<16x1xf32>,
    return
  }
  func.func @transform_0(%arg0: i32) -> (i32, i32) {
    %c0_i32 = arith.constant 0 : i32
    %c0_i32_0 = arith.constant 0 : i32
    return %arg0, %c0_i32 : i32, i32
  }
  func.func @transform_1(%arg0: i32) -> (i32, i32) {
    %c0_i32 = arith.constant 0 : i32
    %c0_i32_0 = arith.constant 0 : i32
    return %arg0, %c0_i32 : i32, i32
  }
  func.func @transform_2(%arg0: i32) -> (i32, i32) {
    %c0_i32 = arith.constant 0 : i32
    %c0_i32_0 = arith.constant 0 : i32
    %c0_i32_1 = arith.constant 0 : i32
    return %c0_i32, %c0_i32_0 : i32, i32
  }
  func.func @transform_3(%arg0: i32) -> (i32, i32) {
    %c0_i32 = arith.constant 0 : i32
    %c0_i32_0 = arith.constant 0 : i32
    %c0_i32_1 = arith.constant 0 : i32
    return %c0_i32, %c0_i32_0 : i32, i32
  }
  func.func @transform_4(%arg0: i32) -> (i32, i32) {
    %c0_i32 = arith.constant 0 : i32
    %c0_i32_0 = arith.constant 0 : i32
    %c0_i32_1 = arith.constant 0 : i32
    return %c0_i32, %c0_i32_0 : i32, i32
  }
  func.func @transform_5(%arg0: i32) -> (i32, i32) {
    %c0_i32 = arith.constant 0 : i32
    %c0_i32_0 = arith.constant 0 : i32
    %c0_i32_1 = arith.constant 0 : i32
    return %c0_i32, %c0_i32_0 : i32, i32
  }
  func.func @transform_6(%arg0: i32) -> (i32, i32) {
    %c0_i32 = arith.constant 0 : i32
    %c0_i32_0 = arith.constant 0 : i32
    return %arg0, %c0_i32 : i32, i32
  }
}

</mosaic_0001>

<llo_original>
// kernel: tpu_custom_call.1
$region0: #{tpu_custom_call.1}
  #allocation0 [shape = 'u32[]', space=smem, size = 0x4, offset = 0x4, fixed_abs, tag = 'smem constant byte address 0x4 - core index']
  #allocation1 [shape = 'u32[72,128]{1,0:T(1,128)}', space=vmem, size = 0x9000, scoped, tag = 'internal scratch']
  %s0 = inlined_call_operand.vmem [shape: f32[40,16], index: 0, kind: input, shape index: {}]
  %s1 = inlined_call_operand.vmem [shape: f32[40,16], index: 1, kind: input, shape index: {}]
  %s2 = inlined_call_operand.vmem [shape: bf16[32,64], index: 2, kind: input, shape index: {}]
  %s3 = inlined_call_operand.vmem [shape: f32[1,64], index: 3, kind: input, shape index: {}]
  %s4 = inlined_call_operand.vmem [shape: bf16[64,64], index: 4, kind: input, shape index: {}]
  %s5 = inlined_call_operand.vmem [shape: f32[1,64], index: 5, kind: input, shape index: {}]
  %s6 = inlined_call_operand.vmem [shape: f32[40,1], index: 6, kind: output, shape index: {}]
  %s7 = sld [smem:[#allocation0]]
  $region105: #{tpu_custom_call.1} parent=0
    _
  %s9 = ssub.s32 1, %s7
  %s10 = scalar_select 0, %s9, %s7
  $region1: #{tpu_custom_call.1} parent=0
    #allocation2 [shape = 'u8[16384]{0}', space=vmem, size = 0x4000, scoped, tag = 'output window, operand 0']
    loop: start=0, step=1, limit=5
    $region2: #{tpu_custom_call.1} parent=1 // loop_pre_header
      _
    $region3: #{tpu_custom_call.1} parent=1 // loop_header
      %s12 = sphi 0, %s16
      %p13 = scmp.ge.s32.totalorder %s12, 5
      %s22 = sphi 0, %s24
      %s25 = sphi 0, %s22
      %s26 = sphi 0, %s25
      %s42 = sphi 0, %s26
      %s48 = sphi 0, %s50
      %s51 = sphi 0, %s48
      %s52 = sphi 0, %s51
      %s68 = sphi 0, %s52
      %s72 = sphi 0, %s72
      %s74 = sphi 0, %s72
      %s75 = sphi 0, %s74
      %s89 = sphi 0, %s75
      %s93 = sphi 0, %s93
      %s95 = sphi 0, %s93
      %s96 = sphi 0, %s95
      %s110 = sphi 0, %s96
      %s114 = sphi 0, %s114
      %s116 = sphi 0, %s114
      %s117 = sphi 0, %s116
      %s131 = sphi 0, %s117
      %s135 = sphi 0, %s135
      %s137 = sphi 0, %s135
      %s138 = sphi 0, %s137
      %s152 = sphi 0, %s138
      %s158 = sphi 0, %s160
      %s161 = sphi 0, %s158
      %s162 = sphi 0, %s161
      %s178 = sphi 0, %s162
    $region4: #{tpu_custom_call.1} parent=1 // loop_header_branch
      %15 = sbr.rel (%p13) target = $region8
    $region5: #{tpu_custom_call.1} parent=1 // loop_body
      %s17 = ssub.s32 %s12, 1
      %s18 = ssub.s32 %s12, 2
      %s19 = sadd.s32 %s12, 1
      %s20 = ssub.s32 %s12, %s19
      %p21 = scmp.eq.s32.totalorder %s20, 0
      %s23 = sadd.s32 %s22, 1
      %s24 = scalar_select %p21, %s22, %s23
      %p27 = pneg %p21
      %p28 = scmp.eq.s32.totalorder %s12, 2
      %p29 = por %p27, %p28
      %p30 = scmp.ne.s32.totalorder %s22, %s25
      %p31 = scmp.eq.s32.totalorder %s12, 0
      %p32 = por %p30, %p31
      %p33 = scmp.ne.s32.totalorder %s22, %s25
      %p34 = scmp.eq.s32.totalorder %s17, 2
      %p35 = por %p33, %p34
      %p36 = scmp.ne.s32.totalorder %s25, %s26
      %p37 = scmp.eq.s32.totalorder %s17, 0
      %p38 = por %p36, %p37
      %p39 = scmp.ne.s32.totalorder %s25, %s26
      %p40 = scmp.eq.s32.totalorder %s18, 2
      %p41 = por %p39, %p40
      %p43 = scmp.ne.s32.totalorder %s26, %s42
      %p44 = scmp.eq.s32.totalorder %s18, 0
      %p45 = por %p43, %p44
      %s46 = ssub.s32 %s12, %s19
      %p47 = scmp.eq.s32.totalorder %s46, 0
      %s49 = sadd.s32 %s48, 1
      %s50 = scalar_select %p47, %s48, %s49
      %p53 = pneg %p47
      %p54 = scmp.eq.s32.totalorder %s12, 2
      %p55 = por %p53, %p54
      %p56 = scmp.ne.s32.totalorder %s48, %s51
      %p57 = scmp.eq.s32.totalorder %s12, 0
      %p58 = por %p56, %p57
      %p59 = scmp.ne.s32.totalorder %s48, %s51
      %p60 = scmp.eq.s32.totalorder %s17, 2
      %p61 = por %p59, %p60
      %p62 = scmp.ne.s32.totalorder %s51, %s52
      %p63 = scmp.eq.s32.totalorder %s17, 0
      %p64 = por %p62, %p63
      %p65 = scmp.ne.s32.totalorder %s51, %s52
      %p66 = scmp.eq.s32.totalorder %s18, 2
      %p67 = por %p65, %p66
      %p69 = scmp.ne.s32.totalorder %s52, %s68
      %p70 = scmp.eq.s32.totalorder %s18, 0
      %p71 = por %p69, %p70
      %s73 = sadd.s32 %s72, 1
      %p76 = scmp.eq.s32.totalorder %s12, 2
      %p77 = scmp.ne.s32.totalorder %s72, %s74
      %p78 = scmp.eq.s32.totalorder %s12, 0
      %p79 = por %p77, %p78
      %p80 = scmp.ne.s32.totalorder %s72, %s74
      %p81 = scmp.eq.s32.totalorder %s17, 2
      %p82 = por %p80, %p81
      %p83 = scmp.ne.s32.totalorder %s74, %s75
      %p84 = scmp.eq.s32.totalorder %s17, 0
      %p85 = por %p83, %p84
      %p86 = scmp.ne.s32.totalorder %s74, %s75
      %p87 = scmp.eq.s32.totalorder %s18, 2
      %p88 = por %p86, %p87
      %p90 = scmp.ne.s32.totalorder %s75, %s89
      %p91 = scmp.eq.s32.totalorder %s18, 0
      %p92 = por %p90, %p91
      %s94 = sadd.s32 %s93, 1
      %p97 = scmp.eq.s32.totalorder %s12, 2
      %p98 = scmp.ne.s32.totalorder %s93, %s95
      %p99 = scmp.eq.s32.totalorder %s12, 0
      %p100 = por %p98, %p99
      %p101 = scmp.ne.s32.totalorder %s93, %s95
      %p102 = scmp.eq.s32.totalorder %s17, 2
      %p103 = por %p101, %p102
      %p104 = scmp.ne.s32.totalorder %s95, %s96
      %p105 = scmp.eq.s32.totalorder %s17, 0
      %p106 = por %p104, %p105
      %p107 = scmp.ne.s32.totalorder %s95, %s96
      %p108 = scmp.eq.s32.totalorder %s18, 2
      %p109 = por %p107, %p108
      %p111 = scmp.ne.s32.totalorder %s96, %s110
      %p112 = scmp.eq.s32.totalorder %s18, 0
      %p113 = por %p111, %p112
      %s115 = sadd.s32 %s114, 1
      %p118 = scmp.eq.s32.totalorder %s12, 2
      %p119 = scmp.ne.s32.totalorder %s114, %s116
      %p120 = scmp.eq.s32.totalorder %s12, 0
      %p121 = por %p119, %p120
      %p122 = scmp.ne.s32.totalorder %s114, %s116
      %p123 = scmp.eq.s32.totalorder %s17, 2
      %p124 = por %p122, %p123
      %p125 = scmp.ne.s32.totalorder %s116, %s117
      %p126 = scmp.eq.s32.totalorder %s17, 0
      %p127 = por %p125, %p126
      %p128 = scmp.ne.s32.totalorder %s116, %s117
      %p129 = scmp.eq.s32.totalorder %s18, 2
      %p130 = por %p128, %p129
      %p132 = scmp.ne.s32.totalorder %s117, %s131
      %p133 = scmp.eq.s32.totalorder %s18, 0
      %p134 = por %p132, %p133
      %s136 = sadd.s32 %s135, 1
      %p139 = scmp.eq.s32.totalorder %s12, 2
      %p140 = scmp.ne.s32.totalorder %s135, %s137
      %p141 = scmp.eq.s32.totalorder %s12, 0
      %p142 = por %p140, %p141
      %p143 = scmp.ne.s32.totalorder %s135, %s137
      %p144 = scmp.eq.s32.totalorder %s17, 2
      %p145 = por %p143, %p144
      %p146 = scmp.ne.s32.totalorder %s137, %s138
      %p147 = scmp.eq.s32.totalorder %s17, 0
      %p148 = por %p146, %p147
      %p149 = scmp.ne.s32.totalorder %s137, %s138
      %p150 = scmp.eq.s32.totalorder %s18, 2
      %p151 = por %p149, %p150
      %p153 = scmp.ne.s32.totalorder %s138, %s152
      %p154 = scmp.eq.s32.totalorder %s18, 0
      %p155 = por %p153, %p154
      %s156 = ssub.s32 %s12, %s19
      %p157 = scmp.eq.s32.totalorder %s156, 0
      %s159 = sadd.s32 %s158, 1
      %s160 = scalar_select %p157, %s158, %s159
      %p163 = pneg %p157
      %p164 = scmp.eq.s32.totalorder %s12, 2
      %p165 = por %p163, %p164
      %p166 = scmp.ne.s32.totalorder %s158, %s161
      %p167 = scmp.eq.s32.totalorder %s12, 0
      %p168 = por %p166, %p167
      %p169 = scmp.ne.s32.totalorder %s158, %s161
      %p170 = scmp.eq.s32.totalorder %s17, 2
      %p171 = por %p169, %p170
      %p172 = scmp.ne.s32.totalorder %s161, %s162
      %p173 = scmp.eq.s32.totalorder %s17, 0
      %p174 = por %p172, %p173
      %p175 = scmp.ne.s32.totalorder %s161, %s162
      %p176 = scmp.eq.s32.totalorder %s18, 2
      %p177 = por %p175, %p176
      %p179 = scmp.ne.s32.totalorder %s162, %s178
      %p180 = scmp.eq.s32.totalorder %s18, 0
      %p181 = por %p179, %p180
      %p182 = scmp.le.s32.totalorder 1, %s12
      %p183 = scmp.lt.s32.totalorder %s12, 4
      %p184 = pnand %p182, %p183
      %p185 = pneg %p184
      // Predicated region
      $region9: #{tpu_custom_call.1} parent=5 // pred_check
        _
      $region10: #{tpu_custom_call.1} parent=5 // pred_check_branch
        %187 = sbr.rel (%p184) target = $region12
      $region11: #{tpu_custom_call.1} parent=5 // pred_region
        %s188 = ssub.s32 %s12, 1
        // Predicated region
        $region13: #{tpu_custom_call.1} parent=11 // pred_check
          %p189 = pneg %p85
        $region14: #{tpu_custom_call.1} parent=11 // pred_check_branch
          %191 = sbr.rel (%p189) target = $region16
        $region15: #{tpu_custom_call.1} parent=11 // pred_region
          _
        $region16: #{tpu_custom_call.1} parent=11 // pred_fallthru
          _
        // Predicated region
        $region17: #{tpu_custom_call.1} parent=11 // pred_check
          %p192 = pneg %p106
        $region18: #{tpu_custom_call.1} parent=11 // pred_check_branch
          %194 = sbr.rel (%p192) target = $region20
        $region19: #{tpu_custom_call.1} parent=11 // pred_region
          _
        $region20: #{tpu_custom_call.1} parent=11 // pred_fallthru
          _
        // Predicated region
        $region21: #{tpu_custom_call.1} parent=11 // pred_check
          %p195 = pneg %p127
        $region22: #{tpu_custom_call.1} parent=11 // pred_check_branch
          %197 = sbr.rel (%p195) target = $region24
        $region23: #{tpu_custom_call.1} parent=11 // pred_region
          _
        $region24: #{tpu_custom_call.1} parent=11 // pred_fallthru
          _
        // Predicated region
        $region25: #{tpu_custom_call.1} parent=11 // pred_check
          %p198 = pneg %p148
        $region26: #{tpu_custom_call.1} parent=11 // pred_check_branch
          %200 = sbr.rel (%p198) target = $region28
        $region27: #{tpu_custom_call.1} parent=11 // pred_region
          _
        $region28: #{tpu_custom_call.1} parent=11 // pred_fallthru
          _
      $region12: #{tpu_custom_call.1} parent=5 // pred_fallthru
        _
      %p201 = scmp.lt.s32.totalorder %s12, 3
      // Predicated region
      $region29: #{tpu_custom_call.1} parent=5 // pred_check
        %p202 = pneg %p201
      $region30: #{tpu_custom_call.1} parent=5 // pred_check_branch
        %204 = sbr.rel (%p202) target = $region32
      $region31: #{tpu_custom_call.1} parent=5 // pred_region
        // Predicated region
        $region33: #{tpu_custom_call.1} parent=31 // pred_check
          %p205 = pneg %p32
        $region34: #{tpu_custom_call.1} parent=31 // pred_check_branch
          %207 = sbr.rel (%p205) target = $region36
        $region35: #{tpu_custom_call.1} parent=31 // pred_region
          %s208 = smul.u32 2, %s12
          %s209 = ssub.s32 5, %s208
          %p210 = scmp.lt.s32.totalorder %s209, 2
          %s211 = scalar_select %p210, %s209, 2
          %s212 = smul.u32 8, %s211
          %p213 = scmp.lt.s32.totalorder %s208, 4
          %s214 = scalar_select %p213, %s208, 4
          %s215 = smul.addr %s214, 8
          %s216 = scalar_lea.vmem %s0, %s215
          %s217 = smul.u32 2, %s12
          %s218 = ssub.s32 5, %s217
          %p219 = scmp.lt.s32.totalorder %s218, 2
          %s220 = scalar_select %p219, %s218, 2
          %s221 = smul.u32 8, %s220
        $region36: #{tpu_custom_call.1} parent=31 // pred_fallthru
          _
        // Predicated region
        $region37: #{tpu_custom_call.1} parent=31 // pred_check
          %p222 = pneg %p58
        $region38: #{tpu_custom_call.1} parent=31 // pred_check_branch
          %224 = sbr.rel (%p222) target = $region40
        $region39: #{tpu_custom_call.1} parent=31 // pred_region
          %s225 = smul.u32 2, %s12
          %s226 = ssub.s32 5, %s225
          %p227 = scmp.lt.s32.totalorder %s226, 2
          %s228 = scalar_select %p227, %s226, 2
          %s229 = smul.u32 8, %s228
          %p230 = scmp.lt.s32.totalorder %s225, 4
          %s231 = scalar_select %p230, %s225, 4
          %s232 = smul.addr %s231, 8
          %s233 = scalar_lea.vmem %s1, %s232
          %s234 = smul.u32 2, %s12
          %s235 = ssub.s32 5, %s234
          %p236 = scmp.lt.s32.totalorder %s235, 2
          %s237 = scalar_select %p236, %s235, 2
          %s238 = smul.u32 8, %s237
        $region40: #{tpu_custom_call.1} parent=31 // pred_fallthru
          _
      $region32: #{tpu_custom_call.1} parent=5 // pred_fallthru
        _
      %p239 = scmp.le.s32.totalorder 1, %s12
      %p240 = scmp.lt.s32.totalorder %s12, 4
      %p241 = pnand %p239, %p240
      %p242 = pneg %p241
      // Predicated region
      $region41: #{tpu_custom_call.1} parent=5 // pred_check
        _
      $region42: #{tpu_custom_call.1} parent=5 // pred_check_branch
        %244 = sbr.rel (%p241) target = $region44
      $region43: #{tpu_custom_call.1} parent=5 // pred_region
        %s245 = ssub.s32 %s12, 1
        %s246 = smul.u32 2, %s17
        %s247 = ssub.s32 5, %s246
        %p248 = scmp.lt.s32.totalorder %s247, 2
        %s249 = scalar_select %p248, %s247, 2
        %s250 = smul.u32 8, %s249
        %p251 = scmp.lt.s32.totalorder %s246, 4
        %s252 = scalar_select %p251, %s246, 4
        %s253 = smul.addr %s252, 8
        %s254 = scalar_lea.vmem %s0, %s253
        %p255 = pneg %p38
        %p256 = pneg %p35
        %s257 = smul.u32 2, %s17
        %s258 = ssub.s32 5, %s257
        %p259 = scmp.lt.s32.totalorder %s258, 2
        %s260 = scalar_select %p259, %s258, 2
        %s261 = smul.u32 8, %s260
        %p262 = scmp.lt.s32.totalorder %s257, 4
        %s263 = scalar_select %p262, %s257, 4
        %s264 = smul.addr %s263, 8
        %s265 = scalar_lea.vmem %s1, %s264
        %p266 = pneg %p64
        %p267 = pneg %p61
        %p268 = pneg %p85
        %p269 = pneg %p82
        %p270 = pneg %p106
        %p271 = pneg %p103
        %p272 = pneg %p127
        %p273 = pneg %p124
        %p274 = pneg %p148
        %p275 = pneg %p145
        %p276 = pneg %p174
        %p277 = pneg %p171
        %s278 = sand.u32 %s161, 1
        %s279 = sand.u32 %s161, 1
        %s280 = smul.addr %s279, 16
        %s281 = scalar_lea.vmem [#allocation2], %s280
        %s282 = smul.u32 2, %s17
        %s283 = ssub.s32 5, %s282
        %p284 = scmp.lt.s32.totalorder %s283, 2
        %s285 = scalar_select %p284, %s283, 2
        %s286 = smul.u32 8, %s285
        %p287 = scmp.lt.s32.totalorder %s282, 4
        %s288 = scalar_select %p287, %s282, 4
        %s289 = smul.addr %s288, 8
        %s290 = scalar_lea.vmem %s0, %s289
        %s291 = smul.u32 2, %s17
        %s292 = ssub.s32 5, %s291
        %p293 = scmp.lt.s32.totalorder %s292, 2
        %s294 = scalar_select %p293, %s292, 2
        %s295 = smul.u32 8, %s294
        %s296 = smul.u32 2, %s17
        %s297 = ssub.s32 5, %s296
        %p298 = scmp.lt.s32.totalorder %s297, 2
        %s299 = scalar_select %p298, %s297, 2
        %s300 = smul.u32 8, %s299
        %p301 = scmp.lt.s32.totalorder %s296, 4
        %s302 = scalar_select %p301, %s296, 4
        %s303 = smul.addr %s302, 8
        %s304 = scalar_lea.vmem %s1, %s303
        %s305 = smul.u32 2, %s17
        %s306 = ssub.s32 5, %s305
        %p307 = scmp.lt.s32.totalorder %s306, 2
        %s308 = scalar_select %p307, %s306, 2
        %s309 = smul.u32 8, %s308
        %s310 = smul.u32 2, %s17
        %s311 = ssub.s32 5, %s310
        %p312 = scmp.lt.s32.totalorder %s311, 2
        %s313 = scalar_select %p312, %s311, 2
        %s314 = smul.u32 8, %s313
        %v316 = vld [vmem:[%s290] sm:$0xff]
        %v317 = vld [vmem:[%s290 + $0x8] sm:$0xff]
        %v318 = vld [vmem:[%s304] sm:$0xff]
        %v319 = vld [vmem:[%s304 + $0x8] sm:$0xff]
        %322 = vrot.lane.b32.xlu0 %v318, 16
        %v323 = vpop.permute.xlu0 %322
        %324 = vrot.lane.b32.xlu0 %v319, 16
        %v325 = vpop.permute.xlu0 %324
        %vm328 = vcmask 130048
        %v329 = vsel %vm328, %v316, %v323
        %v330 = vsel %vm328, %v317, %v325
        %v331 = vpack.c.bf16 %v330, %v329
        %v332 = vld [vmem:[%s2] sm:$0xf]
        %v333 = vld [vmem:[%s2 + $0x4] sm:$0xf]
        %v334 = vld [vmem:[%s2 + $0x8] sm:$0xf]
        %v335 = vld [vmem:[%s2 + $0xc] sm:$0xf]
        %v336 = vld [vmem:[%s3] sm:$0x1]
        %v338 = vperm.slane %v336, 0
        %v344 = vunpack.c.l.b16 %v332
        %v345 = vunpack.c.l.b16 %v333
        %v346 = vunpack.c.l.b16 %v334
        %v347 = vunpack.c.l.b16 %v335
        %v348 = vpack.c.b16 %v345, %v344
        %v349 = vpack.c.b16 %v347, %v346
        %vm352 = vcmask 261120
        %v354 = vsel %vm352, %v331, 0
        %356 = vmatpush.bf16.msra.mxu0 0
        %357 = vmatpush.bf16.msra.mxu0 0
        %358 = vmatpush.bf16.msra.mxu0 0
        %359 = vmatpush.bf16.msra.mxu0 0
        %360 = vmatpush.bf16.msra.mxu0 0
        %361 = vmatpush.bf16.msra.mxu0 0
        %362 = vmatpush.bf16.msra.mxu0 %v349
        %363 = vmatpush.bf16.msra.mxu0 %v348
        %364 = vmatmul.bf16.gmra.mxu0 %v354
        %v365 = vpop.f32.mrf.mxu0
        %v366 = vadd.f32 %v338, %v365
        %v367 = vpop.f32.mrf.mxu0
        %v368 = vadd.f32 %v338, %v367
        %369 = vdwg.mxu0
        %v370 = vmax.f32 %v366, 0.0
        %v371 = vmax.f32 %v368, 0.0
        %v372 = vpack.c.bf16 %v371, %v370
        %v373 = vld [vmem:[%s4] sm:$0xf]
        %v374 = vld [vmem:[%s4 + $0x4] sm:$0xf]
        %v375 = vld [vmem:[%s4 + $0x8] sm:$0xf]
        %v376 = vld [vmem:[%s4 + $0xc] sm:$0xf]
        %v377 = vld [vmem:[%s4 + $0x10] sm:$0xf]
        %v378 = vld [vmem:[%s4 + $0x14] sm:$0xf]
        %v379 = vld [vmem:[%s4 + $0x18] sm:$0xf]
        %v380 = vld [vmem:[%s4 + $0x1c] sm:$0xf]
        %v381 = vld [vmem:[%s5] sm:$0x1]
        %v383 = vperm.slane %v381, 0
        %v393 = vunpack.c.l.b16 %v373
        %v394 = vunpack.c.l.b16 %v374
        %v395 = vunpack.c.l.b16 %v375
        %v396 = vunpack.c.l.b16 %v376
        %v397 = vunpack.c.l.b16 %v377
        %v398 = vunpack.c.l.b16 %v378
        %v399 = vunpack.c.l.b16 %v379
        %v400 = vunpack.c.l.b16 %v380
        %v401 = vpack.c.b16 %v394, %v393
        %v402 = vpack.c.b16 %v396, %v395
        %v403 = vpack.c.b16 %v398, %v397
        %v404 = vpack.c.b16 %v400, %v399
        %vm409 = vcmask 523264
        %v411 = vsel %vm409, %v372, 0
        %413 = vmatpush.bf16.msra.mxu0 0
        %414 = vmatpush.bf16.msra.mxu0 0
        %415 = vmatpush.bf16.msra.mxu0 0
        %416 = vmatpush.bf16.msra.mxu0 0
        %417 = vmatpush.bf16.msra.mxu0 %v404
        %418 = vmatpush.bf16.msra.mxu0 %v403
        %419 = vmatpush.bf16.msra.mxu0 %v402
        %420 = vmatpush.bf16.msra.mxu0 %v401
        %421 = vmatmul.bf16.gmra.mxu0 %v411
        %v422 = vpop.f32.mrf.mxu0
        %v423 = vadd.f32 %v383, %v422
        %v424 = vpop.f32.mrf.mxu0
        %v425 = vadd.f32 %v383, %v424
        %426 = vdwg.mxu0
        %429 = vrot.lane.b32.xlu0 %v423, 96
        %v430 = vpop.permute.xlu0 %429
        %431 = vrot.lane.b32.xlu0 %v425, 96
        %v432 = vpop.permute.xlu0 %431
        %v435 = vmul.f32 %v423, %v430
        %v436 = vmul.f32 %v425, %v432
        %v437 = vsel %vm352, %v435, 0.0
        %438 = vadd.xlane.f32.xlu0 %v437
        %v439 = vpop.xlane.xlu0 %438
        %v440 = vsel %vm352, %v436, 0.0
        %441 = vadd.xlane.f32.xlu0 %v440
        %v442 = vpop.xlane.xlu0 %441
        %v443 = vxor.u32 %v439, 2147483648
        %v444 = vxor.u32 %v442, 2147483648
        %v445 = vmul.f32 %v443, 1.442695
        %v446 = vpow.pop %v445
        %v447 = vmul.f32 %v444, 1.442695
        %v448 = vpow.pop %v447
        %v449 = vadd.f32 %v446, 1.0
        %v450 = vadd.f32 %v448, 1.0
        %v451 = vrcp.pop %v449
        %v452 = vmul.f32 %v449, %v451
        %v453 = vsub.f32 1.0, %v452
        %v454 = vmul.f32 %v451, %v453
        %v455 = vadd.f32 %v451, %v454
        %vm456 = vweird.f32 %v449
        %vm457 = vweird.f32 %v451
        %vm458 = vmor %vm456, %vm457
        %v459 = vsel %vm458, %v451, %v455
        %v460 = vand.u32 2147483647, %v449
        %vm461 = vcmp.eq.f32.partialorder %v460, 8.507059e+37
        %v462 = vand.u32 %v449, 2147483648
        %v463 = vor.u32 1.1754944e-38, %v462
        %v464 = vsel %vm461, %v463, %v459
        %v465 = vmul.f32 1.0, %v464
        %v466 = vrcp.pop %v450
        %v467 = vmul.f32 %v450, %v466
        %v468 = vsub.f32 1.0, %v467
        %v469 = vmul.f32 %v466, %v468
        %v470 = vadd.f32 %v466, %v469
        %vm471 = vweird.f32 %v450
        %vm472 = vweird.f32 %v466
        %vm473 = vmor %vm471, %vm472
        %v474 = vsel %vm473, %v466, %v470
        %v475 = vand.u32 2147483647, %v450
        %vm476 = vcmp.eq.f32.partialorder %v475, 8.507059e+37
        %v477 = vand.u32 %v450, 2147483648
        %v478 = vor.u32 1.1754944e-38, %v477
        %v479 = vsel %vm476, %v478, %v474
        %v480 = vmul.f32 1.0, %v479
        %vm481 = vcmask 7168
        %482 = vst.msk [vmem:[%s281] sm:$0xff] %vm481, %v465
        %483 = vst.msk [vmem:[%s281 + $0x8] sm:$0xff] %vm481, %v480
        %s484 = sand.u32 %s161, 1
        %s485 = sand.u32 %s161, 1
        %s486 = smul.addr %s485, 16
        %s487 = scalar_lea.vmem [#allocation2], %s486
        // Predicated region
        $region45: #{tpu_custom_call.1} parent=43 // pred_check
          %p488 = pneg %p171
        $region46: #{tpu_custom_call.1} parent=43 // pred_check_branch
          %490 = sbr.rel (%p488) target = $region48
        $region47: #{tpu_custom_call.1} parent=43 // pred_region
          %s491 = smul.u32 2, %s17
          %s492 = ssub.s32 5, %s491
          %p493 = scmp.lt.s32.totalorder %s492, 2
          %s494 = scalar_select %p493, %s492, 2
          %s495 = smul.u32 8, %s494
          %p496 = scmp.ne.s32.totalorder 0, %s495
          %s497 = smul.addr %s491, 8
          %s498 = scalar_lea.vmem %s6, %s497
          // Predicated region
          $region49: #{tpu_custom_call.1} parent=47 // pred_check
            %p499 = pneg %p496
          $region50: #{tpu_custom_call.1} parent=47 // pred_check_branch
            %501 = sbr.rel (%p499) target = $region52
          $region51: #{tpu_custom_call.1} parent=47 // pred_region
            // Predicated region
            $region53: #{tpu_custom_call.1} parent=51 // pred_check
              _
            $region54: #{tpu_custom_call.1} parent=51 // pred_check_branch
              %503 = sbr.rel (0) target = $region56
            $region55: #{tpu_custom_call.1} parent=51 // pred_region
              // Predicated region
              $region75: #{tpu_custom_call.1} parent=55 // pred_check
                _
              $region76: #{tpu_custom_call.1} parent=55 // pred_check_branch
                %555 = sbr.rel (0) target = $region78
              $region77: #{tpu_custom_call.1} parent=55 // pred_region
                %s556 = sshrl.u32 %s494, 1
                // While loop
                $region79: #{tpu_custom_call.1} parent=77 // loop_pre_header
                  _
                $region80: #{tpu_custom_call.1} parent=77 // loop_header
                  %s558 = sphi 0, %s560
                  %p559 = scmp.ge.s32.totalorder %s558, %s556
                  %s563 = sphi 0, %s572
                  %s564 = sphi %s487, %s575
                  %s565 = sphi %s498, %s576
                $region81: #{tpu_custom_call.1} parent=77 // loop_header_branch
                  %562 = sbr.rel (%p559) target = $region85
                $region82: #{tpu_custom_call.1} parent=77 // loop_body
                  %v566 = vld [vmem:[%s564] sm:$0xff]
                  %567 = vst [vmem:[%s565] sm:$0xff] %v566
                  %v568 = vld [vmem:[%s564 + $0x8] sm:$0xff]
                  %569 = vst [vmem:[%s565 + $0x8] sm:$0xff] %v568
                  %s570 = sadd.s32 1, %s563
                  %p571 = scmp.ge.s32.totalorder %s570, %s556
                  %s572 = scalar_select %p571, 0, %s570
                  %s573 = smul.u32 %s572, 16
                  %s574 = smul.u32 %s572, 16
                  %s575 = scalar_lea.vmem %s487, %s573 [#allocation2]
                  %s576 = scalar_lea.vmem %s498, %s574
                $region83: #{tpu_custom_call.1} parent=77 // loop_footer
                  %s560 = sadd.s32 %s558, 1
                $region84: #{tpu_custom_call.1} parent=77 // loop_footer_branch
                  %557 = sbr.rel target = $region80
                $region85: #{tpu_custom_call.1} parent=77 // loop_exit
                  _
                %s577 = sshrl.u32 %s494, 1
                %s578 = sand.u32 %s494, 1
                %s579 = smul.u32 %s577, 2
                %s580 = smul.u32 8, %s579
                %s581 = scalar_lea.vmem %s487, %s580 [#allocation2]
                %s582 = smul.u32 8, %s579
                %s583 = scalar_lea.vmem %s498, %s582
                // While loop
                $region86: #{tpu_custom_call.1} parent=77 // loop_pre_header
                  _
                $region87: #{tpu_custom_call.1} parent=77 // loop_header
                  %s585 = sphi 0, %s587
                  %p586 = scmp.ge.s32.totalorder %s585, %s578
                  %s590 = sphi 0, %s597
                  %s591 = sphi %s581, %s600
                  %s592 = sphi %s583, %s601
                $region88: #{tpu_custom_call.1} parent=77 // loop_header_branch
                  %589 = sbr.rel (%p586) target = $region92
                $region89: #{tpu_custom_call.1} parent=77 // loop_body
                  %v593 = vld [vmem:[%s591] sm:$0xff]
                  %594 = vst [vmem:[%s592] sm:$0xff] %v593
                  %s595 = sadd.s32 1, %s590
                  %p596 = scmp.ge.s32.totalorder %s595, %s578
                  %s597 = scalar_select %p596, 0, %s595
                  %s598 = smul.u32 %s597, 8
                  %s599 = smul.u32 %s597, 8
                  %s600 = scalar_lea.vmem %s581, %s598 [#allocation2]
                  %s601 = scalar_lea.vmem %s583, %s599
                $region90: #{tpu_custom_call.1} parent=77 // loop_footer
                  %s587 = sadd.s32 %s585, 1
                $region91: #{tpu_custom_call.1} parent=77 // loop_footer_branch
                  %584 = sbr.rel target = $region87
                $region92: #{tpu_custom_call.1} parent=77 // loop_exit
                  _
              $region78: #{tpu_custom_call.1} parent=55 // pred_fallthru
                _
              // Predicated region
              $region93: #{tpu_custom_call.1} parent=55 // pred_check
                _
              $region94: #{tpu_custom_call.1} parent=55 // pred_check_branch
                %603 = sbr.rel target = $region96
              $region95: #{tpu_custom_call.1} parent=55 // pred_region
                _
              $region96: #{tpu_custom_call.1} parent=55 // pred_fallthru
                _
            $region56: #{tpu_custom_call.1} parent=51 // pred_fallthru
              _
            // Predicated region
            $region57: #{tpu_custom_call.1} parent=51 // pred_check
              _
            $region58: #{tpu_custom_call.1} parent=51 // pred_check_branch
              %505 = sbr.rel target = $region60
            $region59: #{tpu_custom_call.1} parent=51 // pred_region
              %s507 = ssub.s32 256, 1
              %s508 = sshrl.u32 %s494, 1
              // While loop
              $region61: #{tpu_custom_call.1} parent=59 // loop_pre_header
                _
              $region62: #{tpu_custom_call.1} parent=59 // loop_header
                %s510 = sphi 0, %s512
                %p511 = scmp.ge.s32.totalorder %s510, %s508
                %s515 = sphi 0, %s524
                %s516 = sphi %s487, %s527
                %s517 = sphi %s498, %s528
              $region63: #{tpu_custom_call.1} parent=59 // loop_header_branch
                %514 = sbr.rel (%p511) target = $region67
              $region64: #{tpu_custom_call.1} parent=59 // loop_body
                %v518 = vld [vmem:[%s516] sm:%s507]
                %519 = vst [vmem:[%s517] sm:%s507] %v518
                %v520 = vld [vmem:[%s516 + $0x8] sm:%s507]
                %521 = vst [vmem:[%s517 + $0x8] sm:%s507] %v520
                %s522 = sadd.s32 1, %s515
                %p523 = scmp.ge.s32.totalorder %s522, %s508
                %s524 = scalar_select %p523, 0, %s522
                %s525 = smul.u32 %s524, 16
                %s526 = smul.u32 %s524, 16
                %s527 = scalar_lea.vmem %s487, %s525 [#allocation2]
                %s528 = scalar_lea.vmem %s498, %s526
              $region65: #{tpu_custom_call.1} parent=59 // loop_footer
                %s512 = sadd.s32 %s510, 1
              $region66: #{tpu_custom_call.1} parent=59 // loop_footer_branch
                %509 = sbr.rel target = $region62
              $region67: #{tpu_custom_call.1} parent=59 // loop_exit
                _
              %s529 = sshrl.u32 %s494, 1
              %s530 = sand.u32 %s494, 1
              %s531 = smul.u32 %s529, 2
              %s532 = smul.u32 8, %s531
              %s533 = scalar_lea.vmem %s487, %s532 [#allocation2]
              %s534 = smul.u32 8, %s531
              %s535 = scalar_lea.vmem %s498, %s534
              // While loop
              $region68: #{tpu_custom_call.1} parent=59 // loop_pre_header
                _
              $region69: #{tpu_custom_call.1} parent=59 // loop_header
                %s537 = sphi 0, %s539
                %p538 = scmp.ge.s32.totalorder %s537, %s530
                %s542 = sphi 0, %s549
                %s543 = sphi %s533, %s552
                %s544 = sphi %s535, %s553
              $region70: #{tpu_custom_call.1} parent=59 // loop_header_branch
                %541 = sbr.rel (%p538) target = $region74
              $region71: #{tpu_custom_call.1} parent=59 // loop_body
                %v545 = vld [vmem:[%s543] sm:%s507]
                %546 = vst [vmem:[%s544] sm:%s507] %v545
                %s547 = sadd.s32 1, %s542
                %p548 = scmp.ge.s32.totalorder %s547, %s530
                %s549 = scalar_select %p548, 0, %s547
                %s550 = smul.u32 %s549, 8
                %s551 = smul.u32 %s549, 8
                %s552 = scalar_lea.vmem %s533, %s550 [#allocation2]
                %s553 = scalar_lea.vmem %s535, %s551
              $region72: #{tpu_custom_call.1} parent=59 // loop_footer
                %s539 = sadd.s32 %s537, 1
              $region73: #{tpu_custom_call.1} parent=59 // loop_footer_branch
                %536 = sbr.rel target = $region69
              $region74: #{tpu_custom_call.1} parent=59 // loop_exit
                _
            $region60: #{tpu_custom_call.1} parent=51 // pred_fallthru
              _
          $region52: #{tpu_custom_call.1} parent=47 // pred_fallthru
            _
          %604 = vnop
        $region48: #{tpu_custom_call.1} parent=43 // pred_fallthru
          _
      $region44: #{tpu_custom_call.1} parent=5 // pred_fallthru
        _
      %p605 = scmp.le.s32.totalorder 2, %s12
      // Predicated region
      $region97: #{tpu_custom_call.1} parent=5 // pred_check
        %p606 = pneg %p605
      $region98: #{tpu_custom_call.1} parent=5 // pred_check_branch
        %608 = sbr.rel (%p606) target = $region100
      $region99: #{tpu_custom_call.1} parent=5 // pred_region
        %s609 = ssub.s32 %s12, 2
        // Predicated region
        $region101: #{tpu_custom_call.1} parent=99 // pred_check
          %p610 = pneg %p177
        $region102: #{tpu_custom_call.1} parent=99 // pred_check_branch
          %612 = sbr.rel (%p610) target = $region104
        $region103: #{tpu_custom_call.1} parent=99 // pred_region
          %s613 = sand.u32 %s162, 1
          %s614 = sand.u32 %s162, 1
          %s615 = smul.addr %s614, 16
          %s616 = scalar_lea.vmem [#allocation2], %s615
        $region104: #{tpu_custom_call.1} parent=99 // pred_fallthru
          _
      $region100: #{tpu_custom_call.1} parent=5 // pred_fallthru
        _
    $region6: #{tpu_custom_call.1} parent=1 // loop_footer
      %s16 = sadd.s32 1, %s12
    $region7: #{tpu_custom_call.1} parent=1 // loop_footer_branch
      %11 = sbr.rel target = $region3
    $region8: #{tpu_custom_call.1} parent=1 // loop_exit
      _

</llo_original>
